<compile_context>
chip_gen: v6e
topology: v6e:2x2x1
jax: 0.10.0
libtpu: 0.0.40
codegen_flags: <defaults>
</compile_context>

<pallas_src>
import functools
import math

import jax
import jax.numpy as jnp
from jax import lax
from jax.experimental import pallas as pl
from jax.experimental.pallas import tpu as pltpu


def _sinkhorn_kernel(x_ref, y_ref, cost_ref, pi_ref, *,
                     epsilon, iterations, early_stop_threshold, check_every):
    x = x_ref[...]            # (Nx, D) f32  -- one batch slice (batch dim squeezed)
    y = y_ref[...]            # (Ny, D) f32
    Nx, D = x.shape
    Ny = y.shape[0]

    # ---- cost matrix: C[i,j] = sum_d (x[i,d] - y[j,d])**2 (default metric) ----
    # TODO(synk): arbitrary user-supplied `metric` callables are not translated;
    # the default squared-difference metric is hardcoded here.
    if D > 8:
        # MXU decomposition: ||x||^2 + ||y||^2 - 2 x.y^T (one-time cost on the
        # otherwise-idle MXU; worthwhile once D is in the tens or more).
        xy = jnp.einsum("id,jd->ij", x, y, preferred_element_type=jnp.float32)
        x_sq = jnp.sum(x * x, axis=-1, keepdims=True)       # (Nx, 1)
        y_sq = jnp.sum(y * y, axis=-1)                       # (Ny,)
        C = x_sq - 2.0 * xy + y_sq[None, :]
    else:
        C = jnp.zeros((Nx, Ny), jnp.float32)
        for d in range(D):   # D small and static -> unrolled VPU passes
            xd = x[:, d][:, None]     # (Nx, 1)
            yd = y[:, d][None, :]     # (1, Ny)
            diff = xd - yd            # (Nx, Ny)
            C = C + diff * diff

    # Pre-scale once: every per-iteration Boltzmann build is then pure adds.
    inv_eps = 1.0 / epsilon
    negC_eps = C * (-inv_eps)                     # (Nx, Ny)

    log_a = math.log(1.0 / Nx + 1e-8)
    log_b = math.log(1.0 / Ny + 1e-8)

    # TODO(synk): optional bf16 exp inside the logsumexps (v6e/v7x EUP) is not
    # enabled; epsilon=0.01 makes the exponents large and it needs revalidation.
    def lse_rows(K):   # logsumexp over lanes (axis -1) -> (Nx, 1)
        m = jnp.max(K, axis=-1, keepdims=True)
        return jnp.log(jnp.sum(jnp.exp(K - m), axis=-1, keepdims=True)) + m

    def lse_cols(K):   # logsumexp over sublanes (axis 0) -> (1, Ny)
        m = jnp.max(K, axis=0, keepdims=True)
        return jnp.log(jnp.sum(jnp.exp(K - m), axis=0, keepdims=True)) + m

    # Duals carried pre-scaled by 1/epsilon: ue = u/eps (Nx,1), ve = v/eps (1,Ny).
    def cond_fun(carry):
        i, _, _, done = carry
        return jnp.logical_and(i < iterations, done == 0)

    def body_fun(carry):
        i, ue, ve, done = carry
        K = negC_eps + ue + ve                          # pure adds
        ue_new = (log_a - lse_rows(K)) + ue             # == (eps*(log a - lse) + u)/eps
        Kt = K + (ue_new - ue)                          # incremental rebuild with new u
        ve_new = (log_b - lse_cols(Kt)) + ve

        def _check():
            # Per-batch-slice early stop; reductions only run on check iterations.
            diff = epsilon * (jnp.sum(jnp.abs(ue_new - ue))
                              + jnp.sum(jnp.abs(ve_new - ve)))
            return (diff < early_stop_threshold).astype(jnp.int32)

        done_new = lax.cond((i + 1) % check_every == 0, _check, lambda: done)
        return i + 1, ue_new, ve_new, done_new

    init = (jnp.int32(0),
            jnp.zeros((Nx, 1), jnp.float32),
            jnp.zeros((1, Ny), jnp.float32),
            jnp.int32(0))
    _, ue, ve, _ = lax.while_loop(cond_fun, body_fun, init)

    pi = jnp.exp(negC_eps + ue + ve)                                  # (Nx, Ny)
    cost = jnp.sum(jnp.sum(pi * C, axis=-1, keepdims=True),
                   axis=0, keepdims=True)                             # (1, 1)

    cost_ref[...] = cost
    pi_ref[...] = pi


def sinkhorn_knopp(x, y, *, epsilon=0.01, iterations=100,
                   early_stop_threshold=1e-4, return_transport_plan=False,
                   check_every=4):
    """Pallas TPU implementation of SinkhornKnoppSolver.forward.

    x: (B, Nx, D) or (Nx, D) float32; y: (B, Ny, D) or (Ny, D) float32.
    Returns cost of shape (B,) (and the (B, Nx, Ny) transport plan if requested).
    """
    x = jnp.asarray(x, jnp.float32)
    y = jnp.asarray(y, jnp.float32)
    if x.ndim == 2:            # match PyTorch's batch_size=1 handling for 2-D inputs
        x = x[None]
        y = y[None]
    B, Nx, D = x.shape
    By, Ny, Dy = y.shape
    assert B == By and D == Dy

    kernel = functools.partial(
        _sinkhorn_kernel,
        epsilon=float(epsilon),
        iterations=int(iterations),
        early_stop_threshold=float(early_stop_threshold),
        check_every=max(int(check_every), 1),
    )

    # Per-grid-step VMEM budget: double-buffered input/output blocks plus the
    # ~5 live (Nx,Ny) f32 temporaries (C, -C/eps, K, Kt, pi). Only raise the
    # scoped limit if we would exceed the smallest default (v5e: 16 MiB).
    step_bytes = 4 * (2 * (Nx * D + Ny * D)      # x, y blocks (double-buffered)
                      + 2 * (Nx * Ny + 1)        # pi + cost output blocks
                      + 5 * Nx * Ny)             # live temporaries
    vmem_limit_bytes = None
    if step_bytes > (16 << 20):
        vmem_limit_bytes = int(min(2 * step_bytes, 48 << 20))

    # TODO(synk): for production shapes with Ny << 128 a lane-dense relayout
    # (e.g. folding batch into the last axis) would avoid masked partial vregs;
    # not done here because it conflicts with the batch-parallel grid.
    cost, pi = pl.pallas_call(
        kernel,
        grid=(B,),
        in_specs=[
            pl.BlockSpec((None, Nx, D), lambda b: (b, 0, 0)),
            pl.BlockSpec((None, Ny, D), lambda b: (b, 0, 0)),
        ],
        out_specs=[
            pl.BlockSpec((None, 1, 1), lambda b: (b, 0, 0)),
            pl.BlockSpec((None, Nx, Ny), lambda b: (b, 0, 0)),
        ],
        out_shape=[
            jax.ShapeDtypeStruct((B, 1, 1), jnp.float32),
            jax.ShapeDtypeStruct((B, Nx, Ny), jnp.float32),
        ],
        compiler_params=pltpu.CompilerParams(
            dimension_semantics=("parallel",),
            vmem_limit_bytes=vmem_limit_bytes,
        ),
    )(x, y)

    cost = cost[:, 0, 0]
    if return_transport_plan:
        return cost, pi
    return cost


def _sinkhorn_reference(x, y, epsilon=0.01, iterations=100, early_stop_threshold=1e-4):
    """Plain-JAX mirror of the PyTorch module (host-side, global-mean early stop)."""
    B, Nx, _ = x.shape
    Ny = y.shape[1]
    a = jnp.ones((B, Nx), jnp.float32) / Nx
    b = jnp.ones((B, Ny), jnp.float32) / Ny
    u = jnp.zeros((B, Nx), jnp.float32)
    v = jnp.zeros((B, Ny), jnp.float32)
    C = jnp.sum((x[:, :, None, :] - y[:, None, :, :]) ** 2, axis=-1)

    def K(u, v):
        return (-C + u[:, :, None] + v[:, None, :]) / epsilon

    for _ in range(iterations):
        u0, v0 = u, v
        u = epsilon * (jnp.log(a + 1e-8)
                       - jax.scipy.special.logsumexp(K(u, v), axis=-1)) + u
        v = epsilon * (jnp.log(b + 1e-8)
                       - jax.scipy.special.logsumexp(
                           jnp.swapaxes(K(u, v), -1, -2), axis=-1)) + v
        diff = jnp.sum(jnp.abs(u - u0), -1) + jnp.sum(jnp.abs(v - v0), -1)
        if float(jnp.mean(diff)) < early_stop_threshold:
            break
    pi = jnp.exp(K(u, v))
    return jnp.sum(pi * C, axis=(-2, -1))


if __name__ == "__main__":
    key = jax.random.PRNGKey(0)
    kx, ky = jax.random.split(key)
    B, Nx, Ny, D = 2, 8, 8, 4
    x = jax.random.normal(kx, (B, Nx, D), dtype=jnp.float32)
    y = jax.random.normal(ky, (B, Ny, D), dtype=jnp.float32)

    cost, pi = sinkhorn_knopp(x, y, return_transport_plan=True)
    cost = jax.block_until_ready(cost)
    pi = jax.block_until_ready(pi)

    assert cost.shape == (B,), cost.shape
    assert pi.shape == (B, Nx, Ny), pi.shape

    ref = _sinkhorn_reference(x, y)
    if not bool(jnp.allclose(cost, ref, rtol=5e-3, atol=5e-4)):
        raise AssertionError(f"mismatch: kernel={cost}, reference={ref}")

    print("KERNEL_OK")
</pallas_src>

<mosaic_0001>
module attributes {stable_mosaic.version = 11 : i64} {
  func.func @_sinkhorn_kernel(%arg0: i32, %arg1: memref<1x8x4xf32, #tpu.memory_space<vmem>>, %arg2: memref<1x8x4xf32, #tpu.memory_space<vmem>>, %arg3: memref<1x1x1xf32, #tpu.memory_space<vmem>>, %arg4: memref<1x8x8xf32, #tpu.memory_space<vmem>>) attributes {dimension_semantics = [#tpu.dimension_semantics<parallel>], iteration_bounds = array<i64: 2>, scalar_prefetch = 0 : i64, scratch_operands = 0 : i64, tpu.core_type = #tpu.core_type<tc>, window_params = [{transform_indices = @transform_0, window_bounds = array<i64: 1, 8, 4>}, {transform_indices = @transform_1, window_bounds = array<i64: 1, 8, 4>}, {transform_indices = @transform_2, window_bounds = array<i64: 1, 1, 1>}, {transform_indices = @transform_3, window_bounds = array<i64: 1, 8, 8>}]} {
    %c0 = arith.constant 0 : index
    %c0_0 = arith.constant 0 : index
    %c0_1 = arith.constant 0 : index
    %0 = vector.load %arg1[%c0, %c0_0, %c0_1] : memref<1x8x4xf32, #tpu.memory_space<vmem>>, vector<1x8x4xf32>
    %1 = vector.shape_cast %0 : vector<1x8x4xf32> to vector<8x4xf32>
    %c0_2 = arith.constant 0 : index
    %c0_3 = arith.constant 0 : index
    %c0_4 = arith.constant 0 : index
    %2 = vector.load %arg2[%c0_2, %c0_3, %c0_4] : memref<1x8x4xf32, #tpu.memory_space<vmem>>, vector<1x8x4xf32>
    %3 = vector.shape_cast %2 : vector<1x8x4xf32> to vector<8x4xf32>
    %cst = arith.constant 0.000000e+00 : f32
    %4 = vector.broadcast %cst : f32 to vector<8x8xf32>
    %5 = vector.extract_strided_slice %1 {offsets = [0, 0], sizes = [8, 1], strides = [1, 1]} : vector<8x4xf32> to vector<8x1xf32>
    %6 = vector.shape_cast %5 : vector<8x1xf32> to vector<8xf32>
    %7 = vector.shape_cast %6 : vector<8xf32> to vector<8x1xf32>
    %8 = vector.extract_strided_slice %3 {offsets = [0, 0], sizes = [8, 1], strides = [1, 1]} : vector<8x4xf32> to vector<8x1xf32>
    %9 = vector.shape_cast %8 : vector<8x1xf32> to vector<8xf32>
    %10 = vector.shape_cast %9 : vector<8xf32> to vector<1x8xf32>
    %11 = vector.broadcast %7 : vector<8x1xf32> to vector<8x8xf32>
    %12 = vector.broadcast %10 : vector<1x8xf32> to vector<8x8xf32>
    %13 = arith.subf %11, %12 : vector<8x8xf32>
    %14 = arith.mulf %13, %13 : vector<8x8xf32>
    %15 = arith.addf %4, %14 : vector<8x8xf32>
    %16 = vector.extract_strided_slice %1 {offsets = [0, 1], sizes = [8, 1], strides = [1, 1]} : vector<8x4xf32> to vector<8x1xf32>
    %17 = vector.shape_cast %16 : vector<8x1xf32> to vector<8xf32>
    %18 = vector.shape_cast %17 : vector<8xf32> to vector<8x1xf32>
    %19 = vector.extract_strided_slice %3 {offsets = [0, 1], sizes = [8, 1], strides = [1, 1]} : vector<8x4xf32> to vector<8x1xf32>
    %20 = vector.shape_cast %19 : vector<8x1xf32> to vector<8xf32>
    %21 = vector.shape_cast %20 : vector<8xf32> to vector<1x8xf32>
    %22 = vector.broadcast %18 : vector<8x1xf32> to vector<8x8xf32>
    %23 = vector.broadcast %21 : vector<1x8xf32> to vector<8x8xf32>
    %24 = arith.subf %22, %23 : vector<8x8xf32>
    %25 = arith.mulf %24, %24 : vector<8x8xf32>
    %26 = arith.addf %15, %25 : vector<8x8xf32>
    %27 = vector.extract_strided_slice %1 {offsets = [0, 2], sizes = [8, 1], strides = [1, 1]} : vector<8x4xf32> to vector<8x1xf32>
    %28 = vector.shape_cast %27 : vector<8x1xf32> to vector<8xf32>
    %29 = vector.shape_cast %28 : vector<8xf32> to vector<8x1xf32>
    %30 = vector.extract_strided_slice %3 {offsets = [0, 2], sizes = [8, 1], strides = [1, 1]} : vector<8x4xf32> to vector<8x1xf32>
    %31 = vector.shape_cast %30 : vector<8x1xf32> to vector<8xf32>
    %32 = vector.shape_cast %31 : vector<8xf32> to vector<1x8xf32>
    %33 = vector.broadcast %29 : vector<8x1xf32> to vector<8x8xf32>
    %34 = vector.broadcast %32 : vector<1x8xf32> to vector<8x8xf32>
    %35 = arith.subf %33, %34 : vector<8x8xf32>
    %36 = arith.mulf %35, %35 : vector<8x8xf32>
    %37 = arith.addf %26, %36 : vector<8x8xf32>
    %38 = vector.extract_strided_slice %1 {offsets = [0, 3], sizes = [8, 1], strides = [1, 1]} : vector<8x4xf32> to vector<8x1xf32>
    %39 = vector.shape_cast %38 : vector<8x1xf32> to vector<8xf32>
    %40 = vector.shape_cast %39 : vector<8xf32> to vector<8x1xf32>
    %41 = vector.extract_strided_slice %3 {offsets = [0, 3], sizes = [8, 1], strides = [1, 1]} : vector<8x4xf32> to vector<8x1xf32>
    %42 = vector.shape_cast %41 : vector<8x1xf32> to vector<8xf32>
    %43 = vector.shape_cast %42 : vector<8xf32> to vector<1x8xf32>
    %44 = vector.broadcast %40 : vector<8x1xf32> to vector<8x8xf32>
    %45 = vector.broadcast %43 : vector<1x8xf32> to vector<8x8xf32>
    %46 = arith.subf %44, %45 : vector<8x8xf32>
    %47 = arith.mulf %46, %46 : vector<8x8xf32>
    %48 = arith.addf %37, %47 : vector<8x8xf32>
    %cst_5 = arith.constant -1.000000e+02 : f32
    %49 = vector.broadcast %cst_5 : f32 to vector<8x8xf32>
    %50 = arith.mulf %48, %49 : vector<8x8xf32>
    %cst_6 = arith.constant 0.000000e+00 : f32
    %51 = vector.broadcast %cst_6 : f32 to vector<8x1xf32>
    %cst_7 = arith.constant 0.000000e+00 : f32
    %52 = vector.broadcast %cst_7 : f32 to vector<1x8xf32>
    %c0_i32 = arith.constant 0 : i32
    %c0_i32_8 = arith.constant 0 : i32
    %53:4 = scf.while (%arg5 = %c0_i32, %arg6 = %51, %arg7 = %52, %arg8 = %c0_i32_8) : (i32, vector<8x1xf32>, vector<1x8xf32>, i32) -> (i32, vector<8x1xf32>, vector<1x8xf32>, i32) {
      %c100_i32 = arith.constant 100 : i32
      %70 = arith.cmpi slt, %arg5, %c100_i32 : i32
      %c0_i32_17 = arith.constant 0 : i32
      %71 = arith.cmpi eq, %arg8, %c0_i32_17 : i32
      %72 = arith.andi %70, %71 : i1
      scf.condition(%72) %arg5, %arg6, %arg7, %arg8 : i32, vector<8x1xf32>, vector<1x8xf32>, i32
    } do {
    ^bb0(%arg5: i32, %arg6: vector<8x1xf32>, %arg7: vector<1x8xf32>, %arg8: i32):
      %70 = vector.broadcast %arg6 : vector<8x1xf32> to vector<8x8xf32>
      %71 = arith.addf %50, %70 : vector<8x8xf32>
      %72 = vector.broadcast %arg7 : vector<1x8xf32> to vector<8x8xf32>
      %73 = arith.addf %71, %72 : vector<8x8xf32>
      %cst_17 = arith.constant dense<0xFF800000> : vector<8xf32>
      %74 = vector.multi_reduction <maximumf>, %73, %cst_17 [1] : vector<8x8xf32> to vector<8xf32>
      %75 = vector.shape_cast %74 : vector<8xf32> to vector<8x1xf32>
      %76 = vector.broadcast %75 : vector<8x1xf32> to vector<8x8xf32>
      %77 = arith.subf %73, %76 : vector<8x8xf32>
      %78 = math.exp %77 : vector<8x8xf32>
      %cst_18 = arith.constant dense<0.000000e+00> : vector<8xf32>
      %79 = vector.multi_reduction <add>, %78, %cst_18 [1] : vector<8x8xf32> to vector<8xf32>
      %80 = vector.shape_cast %79 : vector<8xf32> to vector<8x1xf32>
      %81 = math.log %80 : vector<8x1xf32>
      %82 = arith.addf %81, %75 : vector<8x1xf32>
      %cst_19 = arith.constant -2.07944155 : f32
      %83 = vector.broadcast %cst_19 : f32 to vector<8x1xf32>
      %84 = arith.subf %83, %82 : vector<8x1xf32>
      %85 = arith.addf %84, %arg6 : vector<8x1xf32>
      %86 = arith.subf %85, %arg6 : vector<8x1xf32>
      %87 = vector.broadcast %86 : vector<8x1xf32> to vector<8x8xf32>
      %88 = arith.addf %73, %87 : vector<8x8xf32>
      %cst_20 = arith.constant dense<0xFF800000> : vector<8xf32>
      %89 = vector.multi_reduction <maximumf>, %88, %cst_20 [0] : vector<8x8xf32> to vector<8xf32>
      %90 = vector.shape_cast %89 : vector<8xf32> to vector<1x8xf32>
      %91 = vector.broadcast %90 : vector<1x8xf32> to vector<8x8xf32>
      %92 = arith.subf %88, %91 : vector<8x8xf32>
      %93 = math.exp %92 : vector<8x8xf32>
      %cst_21 = arith.constant dense<0.000000e+00> : vector<8xf32>
      %94 = vector.multi_reduction <add>, %93, %cst_21 [0] : vector<8x8xf32> to vector<8xf32>
      %95 = vector.shape_cast %94 : vector<8xf32> to vector<1x8xf32>
      %96 = math.log %95 : vector<1x8xf32>
      %97 = arith.addf %96, %90 : vector<1x8xf32>
      %cst_22 = arith.constant -2.07944155 : f32
      %98 = vector.broadcast %cst_22 : f32 to vector<1x8xf32>
      %99 = arith.subf %98, %97 : vector<1x8xf32>
      %100 = arith.addf %99, %arg7 : vector<1x8xf32>
      %c1_i32 = arith.constant 1 : i32
      %101 = arith.addi %arg5, %c1_i32 : i32
      %c4_i32 = arith.constant 4 : i32
      %c0_i32_23 = arith.constant 0 : i32
      %102 = arith.cmpi eq, %c4_i32, %c0_i32_23 : i32
      %c1_i32_24 = arith.constant 1 : i32
      %103 = arith.select %102, %c1_i32_24, %c4_i32 : i32
      %104 = arith.remsi %101, %103 : i32
      %c0_i32_25 = arith.constant 0 : i32
      %105 = arith.cmpi ne, %104, %c0_i32_25 : i32
      %c0_i32_26 = arith.constant 0 : i32
      %106 = arith.cmpi slt, %104, %c0_i32_26 : i32
      %c0_i32_27 = arith.constant 0 : i32
      %107 = arith.cmpi slt, %103, %c0_i32_27 : i32
      %108 = arith.xori %106, %107 : i1
      %109 = arith.andi %108, %105 : i1
      %110 = arith.addi %104, %103 : i32
      %111 = arith.select %109, %110, %104 : i32
      %c0_i32_28 = arith.constant 0 : i32
      %112 = arith.cmpi eq, %111, %c0_i32_28 : i32
      %113 = arith.extui %112 : i1 to i32
      %c0_i32_29 = arith.constant 0 : i32
      %114 = arith.cmpi ne, %113, %c0_i32_29 : i32
      %115 = scf.if %114 -> (i32) {
        %117 = arith.subf %85, %arg6 : vector<8x1xf32>
        %118 = math.absf %117 : vector<8x1xf32>
        %119 = vector.shape_cast %118 : vector<8x1xf32> to vector<1x8x1xf32>
        %cst_31 = arith.constant dense<0.000000e+00> : vector<1xf32>
        %120 = vector.multi_reduction <add>, %119, %cst_31 [1, 2] : vector<1x8x1xf32> to vector<1xf32>
        %121 = vector.shape_cast %120 : vector<1xf32> to vector<1x1x1xf32>
        %122 = vector.extract %121[0, 0, 0] : f32 from vector<1x1x1xf32>
        %123 = arith.subf %100, %arg7 : vector<1x8xf32>
        %124 = math.absf %123 : vector<1x8xf32>
        %125 = vector.shape_cast %124 : vector<1x8xf32> to vector<1x1x8xf32>
        %cst_32 = arith.constant dense<0.000000e+00> : vector<1xf32>
        %126 = vector.multi_reduction <add>, %125, %cst_32 [1, 2] : vector<1x1x8xf32> to vector<1xf32>
        %127 = vector.shape_cast %126 : vector<1xf32> to vector<1x1x1xf32>
        %128 = vector.extract %127[0, 0, 0] : f32 from vector<1x1x1xf32>
        %129 = arith.addf %122, %128 : f32
        %cst_33 = arith.constant 0.00999999977 : f32
        %130 = arith.mulf %cst_33, %129 : f32
        %cst_34 = arith.constant 9.99999974E-5 : f32
        %131 = arith.cmpf olt, %130, %cst_34 : f32
        %132 = arith.extui %131 : i1 to i32
        scf.yield %132 : i32
      } else {
        scf.yield %arg8 : i32
      }
      %c1_i32_30 = arith.constant 1 : i32
      %116 = arith.addi %arg5, %c1_i32_30 : i32
      scf.yield %116, %85, %100, %115 : i32, vector<8x1xf32>, vector<1x8xf32>, i32
    }
    %54 = vector.broadcast %53#1 : vector<8x1xf32> to vector<8x8xf32>
    %55 = arith.addf %50, %54 : vector<8x8xf32>
    %56 = vector.broadcast %53#2 : vector<1x8xf32> to vector<8x8xf32>
    %57 = arith.addf %55, %56 : vector<8x8xf32>
    %58 = math.exp %57 : vector<8x8xf32>
    %59 = arith.mulf %58, %48 : vector<8x8xf32>
    %cst_9 = arith.constant dense<0.000000e+00> : vector<8xf32>
    %60 = vector.multi_reduction <add>, %59, %cst_9 [1] : vector<8x8xf32> to vector<8xf32>
    %61 = vector.shape_cast %60 : vector<8xf32> to vector<8x1xf32>
    %cst_10 = arith.constant dense<0.000000e+00> : vector<1xf32>
    %62 = vector.multi_reduction <add>, %61, %cst_10 [0] : vector<8x1xf32> to vector<1xf32>
    %63 = vector.shape_cast %62 : vector<1xf32> to vector<1x1xf32>
    %c0_11 = arith.constant 0 : index
    %c0_12 = arith.constant 0 : index
    %c0_13 = arith.constant 0 : index
    %64 = vector.load %arg3[%c0_11, %c0_12, %c0_13] : memref<1x1x1xf32, #tpu.memory_space<vmem>>, vector<1x1x1xf32>
    %65 = vector.shape_cast %64 : vector<1x1x1xf32> to vector<1x1xf32>
    %66 = vector.shape_cast %63 : vector<1x1xf32> to vector<1x1x1xf32>
    tpu.vector_store %arg3[%c0_11, %c0_12, %c0_13], %66 {strides = array<i32>} : memref<1x1x1xf32, #tpu.memory_space<vmem>>, vector<1x1x1xf32>,
    %c0_14 = arith.constant 0 : index
    %c0_15 = arith.constant 0 : index
    %c0_16 = arith.constant 0 : index
    %67 = vector.load %arg4[%c0_14, %c0_15, %c0_16] : memref<1x8x8xf32, #tpu.memory_space<vmem>>, vector<1x8x8xf32>
    %68 = vector.shape_cast %67 : vector<1x8x8xf32> to vector<8x8xf32>
    %69 = vector.shape_cast %58 : vector<8x8xf32> to vector<1x8x8xf32>
    tpu.vector_store %arg4[%c0_14, %c0_15, %c0_16], %69 {strides = array<i32>} : memref<1x8x8xf32, #tpu.memory_space<vmem>>, vector<1x8x8xf32>,
    return
  }
  func.func @transform_0(%arg0: i32) -> (i32, i32, i32) {
    %c0_i32 = arith.constant 0 : i32
    %c0_i32_0 = arith.constant 0 : i32
    %c0_i32_1 = arith.constant 0 : i32
    return %arg0, %c0_i32, %c0_i32_0 : i32, i32, i32
  }
  func.func @transform_1(%arg0: i32) -> (i32, i32, i32) {
    %c0_i32 = arith.constant 0 : i32
    %c0_i32_0 = arith.constant 0 : i32
    %c0_i32_1 = arith.constant 0 : i32
    return %arg0, %c0_i32, %c0_i32_0 : i32, i32, i32
  }
  func.func @transform_2(%arg0: i32) -> (i32, i32, i32) {
    %c0_i32 = arith.constant 0 : i32
    %c0_i32_0 = arith.constant 0 : i32
    %c0_i32_1 = arith.constant 0 : i32
    return %arg0, %c0_i32, %c0_i32_0 : i32, i32, i32
  }
  func.func @transform_3(%arg0: i32) -> (i32, i32, i32) {
    %c0_i32 = arith.constant 0 : i32
    %c0_i32_0 = arith.constant 0 : i32
    %c0_i32_1 = arith.constant 0 : i32
    return %arg0, %c0_i32, %c0_i32_0 : i32, i32, i32
  }
}

</mosaic_0001>

<llo_original>
// kernel: tpu_custom_call.1
$region0: #{tpu_custom_call.1}
  #allocation0 [shape = 'u32[]', space=smem, size = 0x4, offset = 0x4, fixed_abs, tag = 'smem constant byte address 0x4 - core index']
  #allocation1 [shape = 'u32[144,128]{1,0:T(1,128)}', space=vmem, size = 0x12000, scoped, tag = 'internal scratch']
  %s0 = inlined_call_operand.vmem [shape: f32[2,8,4], index: 0, kind: input, shape index: {}]
  %s1 = inlined_call_operand.vmem [shape: f32[2,8,4], index: 1, kind: input, shape index: {}]
  %s2 = inlined_call_operand.vmem [shape: f32[2,1,1], index: 2, kind: output, shape index: {0}]
  %s3 = inlined_call_operand.hbm [shape: f32[2,8,8], index: 3, kind: output, shape index: {1}]
  %4 = xla_tuple %s2, %s3
  %s5 = sld [smem:[#allocation0]]
  $region64: #{tpu_custom_call.1} parent=0
    _
  %s7 = ssub.s32 1, %s5
  %s8 = scalar_select 0, %s7, %s5
  $region1: #{tpu_custom_call.1} parent=0
    #allocation2 [shape = 'u8[8192]{0}', space=vmem, size = 0x2000, scoped, tag = 'output window, operand 1']
    #allocation3 [shape = 's32[2]{0}', space=sflag, size = 0x8, scoped, tag = 'scoped memory for tpu_custom_call.1']
    %9 = vsyncpa [#allocation3], 0
    %s10 = scalar_lea.sflag [#allocation3], 1
    %11 = vsyncpa %s10, 0
    loop: start=0, step=1, limit=4
    $region2: #{tpu_custom_call.1} parent=1 // loop_pre_header
      _
    $region3: #{tpu_custom_call.1} parent=1 // loop_header
      %s13 = sphi 0, %s17
      %p14 = scmp.ge.s32.totalorder %s13, 4
      %s23 = sphi 0, %s25
      %s26 = sphi 0, %s23
      %s27 = sphi 0, %s26
      %s43 = sphi 0, %s27
      %s49 = sphi 0, %s51
      %s52 = sphi 0, %s49
      %s53 = sphi 0, %s52
      %s69 = sphi 0, %s53
      %s75 = sphi 0, %s77
      %s78 = sphi 0, %s75
      %s79 = sphi 0, %s78
      %s95 = sphi 0, %s79
      %s101 = sphi 0, %s103
      %s104 = sphi 0, %s101
      %s105 = sphi 0, %s104
      %s121 = sphi 0, %s105
    $region4: #{tpu_custom_call.1} parent=1 // loop_header_branch
      %16 = sbr.rel (%p14) target = $region8
    $region5: #{tpu_custom_call.1} parent=1 // loop_body
      %s18 = ssub.s32 %s13, 1
      %s19 = ssub.s32 %s13, 2
      %s20 = sadd.s32 %s13, 1
      %s21 = ssub.s32 %s13, %s20
      %p22 = scmp.eq.s32.totalorder %s21, 0
      %s24 = sadd.s32 %s23, 1
      %s25 = scalar_select %p22, %s23, %s24
      %p28 = pneg %p22
      %p29 = scmp.eq.s32.totalorder %s13, 1
      %p30 = por %p28, %p29
      %p31 = scmp.ne.s32.totalorder %s23, %s26
      %p32 = scmp.eq.s32.totalorder %s13, 0
      %p33 = por %p31, %p32
      %p34 = scmp.ne.s32.totalorder %s23, %s26
      %p35 = scmp.eq.s32.totalorder %s18, 1
      %p36 = por %p34, %p35
      %p37 = scmp.ne.s32.totalorder %s26, %s27
      %p38 = scmp.eq.s32.totalorder %s18, 0
      %p39 = por %p37, %p38
      %p40 = scmp.ne.s32.totalorder %s26, %s27
      %p41 = scmp.eq.s32.totalorder %s19, 1
      %p42 = por %p40, %p41
      %p44 = scmp.ne.s32.totalorder %s27, %s43
      %p45 = scmp.eq.s32.totalorder %s19, 0
      %p46 = por %p44, %p45
      %s47 = ssub.s32 %s13, %s20
      %p48 = scmp.eq.s32.totalorder %s47, 0
      %s50 = sadd.s32 %s49, 1
      %s51 = scalar_select %p48, %s49, %s50
      %p54 = pneg %p48
      %p55 = scmp.eq.s32.totalorder %s13, 1
      %p56 = por %p54, %p55
      %p57 = scmp.ne.s32.totalorder %s49, %s52
      %p58 = scmp.eq.s32.totalorder %s13, 0
      %p59 = por %p57, %p58
      %p60 = scmp.ne.s32.totalorder %s49, %s52
      %p61 = scmp.eq.s32.totalorder %s18, 1
      %p62 = por %p60, %p61
      %p63 = scmp.ne.s32.totalorder %s52, %s53
      %p64 = scmp.eq.s32.totalorder %s18, 0
      %p65 = por %p63, %p64
      %p66 = scmp.ne.s32.totalorder %s52, %s53
      %p67 = scmp.eq.s32.totalorder %s19, 1
      %p68 = por %p66, %p67
      %p70 = scmp.ne.s32.totalorder %s53, %s69
      %p71 = scmp.eq.s32.totalorder %s19, 0
      %p72 = por %p70, %p71
      %s73 = ssub.s32 %s13, %s20
      %p74 = scmp.eq.s32.totalorder %s73, 0
      %s76 = sadd.s32 %s75, 1
      %s77 = scalar_select %p74, %s75, %s76
      %p80 = pneg %p74
      %p81 = scmp.eq.s32.totalorder %s13, 1
      %p82 = por %p80, %p81
      %p83 = scmp.ne.s32.totalorder %s75, %s78
      %p84 = scmp.eq.s32.totalorder %s13, 0
      %p85 = por %p83, %p84
      %p86 = scmp.ne.s32.totalorder %s75, %s78
      %p87 = scmp.eq.s32.totalorder %s18, 1
      %p88 = por %p86, %p87
      %p89 = scmp.ne.s32.totalorder %s78, %s79
      %p90 = scmp.eq.s32.totalorder %s18, 0
      %p91 = por %p89, %p90
      %p92 = scmp.ne.s32.totalorder %s78, %s79
      %p93 = scmp.eq.s32.totalorder %s19, 1
      %p94 = por %p92, %p93
      %p96 = scmp.ne.s32.totalorder %s79, %s95
      %p97 = scmp.eq.s32.totalorder %s19, 0
      %p98 = por %p96, %p97
      %s99 = ssub.s32 %s13, %s20
      %p100 = scmp.eq.s32.totalorder %s99, 0
      %s102 = sadd.s32 %s101, 1
      %s103 = scalar_select %p100, %s101, %s102
      %p106 = pneg %p100
      %p107 = scmp.eq.s32.totalorder %s13, 1
      %p108 = por %p106, %p107
      %p109 = scmp.ne.s32.totalorder %s101, %s104
      %p110 = scmp.eq.s32.totalorder %s13, 0
      %p111 = por %p109, %p110
      %p112 = scmp.ne.s32.totalorder %s101, %s104
      %p113 = scmp.eq.s32.totalorder %s18, 1
      %p114 = por %p112, %p113
      %p115 = scmp.ne.s32.totalorder %s104, %s105
      %p116 = scmp.eq.s32.totalorder %s18, 0
      %p117 = por %p115, %p116
      %p118 = scmp.ne.s32.totalorder %s104, %s105
      %p119 = scmp.eq.s32.totalorder %s19, 1
      %p120 = por %p118, %p119
      %p122 = scmp.ne.s32.totalorder %s105, %s121
      %p123 = scmp.eq.s32.totalorder %s19, 0
      %p124 = por %p122, %p123
      %p125 = scmp.le.s32.totalorder 1, %s13
      %p126 = scmp.lt.s32.totalorder %s13, 3
      %p127 = pnand %p125, %p126
      %p128 = pneg %p127
      // Predicated region
      $region9: #{tpu_custom_call.1} parent=5 // pred_check
        _
      $region10: #{tpu_custom_call.1} parent=5 // pred_check_branch
        %130 = sbr.rel (%p127) target = $region12
      $region11: #{tpu_custom_call.1} parent=5 // pred_region
        %s131 = ssub.s32 %s13, 1
      $region12: #{tpu_custom_call.1} parent=5 // pred_fallthru
        _
      %p132 = scmp.lt.s32.totalorder %s13, 2
      // Predicated region
      $region13: #{tpu_custom_call.1} parent=5 // pred_check
        %p133 = pneg %p132
      $region14: #{tpu_custom_call.1} parent=5 // pred_check_branch
        %135 = sbr.rel (%p133) target = $region16
      $region15: #{tpu_custom_call.1} parent=5 // pred_region
        // Predicated region
        $region17: #{tpu_custom_call.1} parent=15 // pred_check
          %p136 = pneg %p33
        $region18: #{tpu_custom_call.1} parent=15 // pred_check_branch
          %138 = sbr.rel (%p136) target = $region20
        $region19: #{tpu_custom_call.1} parent=15 // pred_region
          %p139 = scmp.lt.s32.totalorder %s13, 1
          %s140 = scalar_select %p139, %s13, 1
          %s141 = smul.addr %s140, 8
          %s142 = scalar_lea.vmem %s0, %s141
        $region20: #{tpu_custom_call.1} parent=15 // pred_fallthru
          _
        // Predicated region
        $region21: #{tpu_custom_call.1} parent=15 // pred_check
          %p143 = pneg %p59
        $region22: #{tpu_custom_call.1} parent=15 // pred_check_branch
          %145 = sbr.rel (%p143) target = $region24
        $region23: #{tpu_custom_call.1} parent=15 // pred_region
          %p146 = scmp.lt.s32.totalorder %s13, 1
          %s147 = scalar_select %p146, %s13, 1
          %s148 = smul.addr %s147, 8
          %s149 = scalar_lea.vmem %s1, %s148
        $region24: #{tpu_custom_call.1} parent=15 // pred_fallthru
          _
      $region16: #{tpu_custom_call.1} parent=5 // pred_fallthru
        _
      %p150 = scmp.le.s32.totalorder 1, %s13
      %p151 = scmp.lt.s32.totalorder %s13, 3
      %p152 = pnand %p150, %p151
      %p153 = pneg %p152
      // Predicated region
      $region25: #{tpu_custom_call.1} parent=5 // pred_check
        _
      $region26: #{tpu_custom_call.1} parent=5 // pred_check_branch
        %155 = sbr.rel (%p152) target = $region28
      $region27: #{tpu_custom_call.1} parent=5 // pred_region
        %s156 = ssub.s32 %s13, 1
        %p157 = scmp.lt.s32.totalorder %s18, 1
        %s158 = scalar_select %p157, %s18, 1
        %s159 = smul.addr %s158, 8
        %s160 = scalar_lea.vmem %s0, %s159
        %p161 = pneg %p39
        %p162 = pneg %p36
        %p163 = scmp.lt.s32.totalorder %s18, 1
        %s164 = scalar_select %p163, %s18, 1
        %s165 = smul.addr %s164, 8
        %s166 = scalar_lea.vmem %s1, %s165
        %p167 = pneg %p65
        %p168 = pneg %p62
        %p169 = pneg %p91
        %p170 = pneg %p88
        %p171 = scmp.lt.s32.totalorder %s18, 1
        %s172 = scalar_select %p171, %s18, 1
        %s173 = scalar_lea.vmem %s2, %s172
        %p174 = pneg %p117
        %p175 = pneg %p114
        %s176 = sand.u32 %s104, 1
        %s177 = scalar_lea.sflag [#allocation3], %s176
        %s178 = sand.u32 %s104, 1
        %s179 = smul.addr %s178, 8
        %s180 = scalar_lea.vmem [#allocation2], %s179
        %p181 = scmp.lt.s32.totalorder %s18, 1
        %s182 = scalar_select %p181, %s18, 1
        %s183 = smul.addr %s182, 8
        %s184 = scalar_lea.vmem %s0, %s183
        %p185 = scmp.lt.s32.totalorder %s18, 1
        %s186 = scalar_select %p185, %s18, 1
        %s187 = smul.addr %s186, 8
        %s188 = scalar_lea.vmem %s1, %s187
        %p189 = scmp.lt.s32.totalorder %s18, 1
        %s190 = scalar_select %p189, %s18, 1
        %s191 = scalar_lea.vmem %s2, %s190
        %v192 = vld [vmem:[%s184] sm:$0xff]
        %v193 = vld [vmem:[%s188] sm:$0xff]
        %195 = vset.pattern.permute.xlu0 0
        %196 = vperm.xlu0 %195, %v192
        %v197 = vpop.permute.xlu0 %196
        %200 = vset.pattern.permute.xlu0 0
        %201 = vperm.xlu0 %200, %v193
        %v202 = vpop.permute.xlu0 %201
        %v203 = vlaneseq
        %v204 = vand.u32 %v203, 127
        %v205 = vlaneseq
        %v206 = vshrl.u32 %v205, 7
        %v207 = vsub.s32 %v204, %v206
        %v208 = vrot.slane %v202, %v207
        %vm209 = vcmask 1042434
        %v210 = vsel %vm209, %v208, %v208
        %vm211 = vcmask 1043459
        %v212 = vsel %vm211, %v208, %v210
        %vm213 = vcmask 1044484
        %v214 = vsel %vm213, %v208, %v212
        %vm215 = vcmask 1045509
        %v216 = vsel %vm215, %v208, %v214
        %vm217 = vcmask 1046534
        %v218 = vsel %vm217, %v208, %v216
        %vm219 = vcmask 1047559
        %v220 = vsel %vm219, %v208, %v218
        %v222 = vsub.f32 %v197, %v220
        %v223 = vmul.f32 %v222, %v222
        %v224 = vadd.f32 %v223, 0.0
        %225 = vset.pattern.permute.xlu0 1
        %226 = vperm.xlu0 %225, %v192
        %v227 = vpop.permute.xlu0 %226
        %229 = vset.pattern.permute.xlu0 1
        %230 = vperm.xlu0 %229, %v193
        %v231 = vpop.permute.xlu0 %230
        %v232 = vlaneseq
        %v233 = vshrl.u32 %v232, 7
        %v234 = vsub.s32 %v204, %v233
        %v235 = vrot.slane %v231, %v234
        %v236 = vsel %vm209, %v235, %v235
        %v237 = vsel %vm211, %v235, %v236
        %v238 = vsel %vm213, %v235, %v237
        %v239 = vsel %vm215, %v235, %v238
        %v240 = vsel %vm217, %v235, %v239
        %v241 = vsel %vm219, %v235, %v240
        %v243 = vsub.f32 %v227, %v241
        %v244 = vmul.f32 %v243, %v243
        %v245 = vadd.f32 %v224, %v244
        %246 = vset.pattern.permute.xlu0 2
        %247 = vperm.xlu0 %246, %v192
        %v248 = vpop.permute.xlu0 %247
        %250 = vset.pattern.permute.xlu0 2
        %251 = vperm.xlu0 %250, %v193
        %v252 = vpop.permute.xlu0 %251
        %v253 = vlaneseq
        %v254 = vshrl.u32 %v253, 7
        %v255 = vsub.s32 %v204, %v254
        %v256 = vrot.slane %v252, %v255
        %v257 = vsel %vm209, %v256, %v256
        %v258 = vsel %vm211, %v256, %v257
        %v259 = vsel %vm213, %v256, %v258
        %v260 = vsel %vm215, %v256, %v259
        %v261 = vsel %vm217, %v256, %v260
        %v262 = vsel %vm219, %v256, %v261
        %v264 = vsub.f32 %v248, %v262
        %v265 = vmul.f32 %v264, %v264
        %v266 = vadd.f32 %v245, %v265
        %267 = vset.pattern.permute.xlu0 3
        %268 = vperm.xlu0 %267, %v192
        %v269 = vpop.permute.xlu0 %268
        %271 = vset.pattern.permute.xlu0 3
        %272 = vperm.xlu0 %271, %v193
        %v273 = vpop.permute.xlu0 %272
        %v274 = vlaneseq
        %v275 = vshrl.u32 %v274, 7
        %v276 = vsub.s32 %v204, %v275
        %v277 = vrot.slane %v273, %v276
        %v278 = vsel %vm209, %v277, %v277
        %v279 = vsel %vm211, %v277, %v278
        %v280 = vsel %vm213, %v277, %v279
        %v281 = vsel %vm215, %v277, %v280
        %v282 = vsel %vm217, %v277, %v281
        %v283 = vsel %vm219, %v277, %v282
        %v285 = vsub.f32 %v269, %v283
        %v286 = vmul.f32 %v285, %v285
        %v287 = vadd.f32 %v266, %v286
        %v288 = vmul.f32 %v287, -100.0
        // While loop
        $region29: #{tpu_custom_call.1} parent=27 // loop_pre_header
          _
        $region30: #{tpu_custom_call.1} parent=27 // loop_header
          %s290 = sphi 0, %s341
          %v291 = vphi 0.0, %v316
          %v292 = vphi 0.0, %v340
          %s293 = sphi 0, %s391
          %p294 = scmp.lt.s32.totalorder %s290, 100
          %p295 = scmp.eq.s32.totalorder %s293, 0
          %p296 = pnand %p294, %p295
          %p297 = pneg %p296
        $region31: #{tpu_custom_call.1} parent=27 // loop_header_branch
          %299 = sbr.rel (%p296) target = $region35
        $region32: #{tpu_custom_call.1} parent=27 // loop_body
          %v300 = vadd.f32 %v288, %v291
          %v301 = vadd.f32 %v300, %v292
          %vm302 = vcmask 64512
          %v303 = vsel %vm302, %v301, -inf
          %304 = vmax.xlane.f32.xlu0 %v303
          %v305 = vpop.xlane.xlu0 %304
          %v306 = vsub.f32 %v301, %v305
          %v307 = vmul.f32 %v306, 1.442695
          %v308 = vpow.pop %v307
          %v309 = vsel %vm302, %v308, 0.0
          %310 = vadd.xlane.f32.xlu0 %v309
          %v311 = vpop.xlane.xlu0 %310
          %v312 = vlog2.pop %v311
          %v313 = vmul.f32 %v312, 0.6931472
          %v314 = vadd.f32 %v313, %v305
          %v315 = vsub.f32 -2.0794415, %v314
          %v316 = vadd.f32 %v315, %v291
          %v317 = vsub.f32 %v316, %v291
          %v318 = vadd.f32 %v301, %v317
          %v319 = vsel %vm302, %v318, -inf
          %v320 = vrot.slane %v319, 4
          %v321 = vmax.f32 %v319, %v320
          %v322 = vrot.slane %v321, 2
          %v323 = vmax.f32 %v321, %v322
          %v324 = vrot.slane %v323, 1
          %v325 = vmax.f32 %v323, %v324
          %v326 = vsub.f32 %v318, %v325
          %v327 = vmul.f32 %v326, 1.442695
          %v328 = vpow.pop %v327
          %v329 = vsel %vm302, %v328, 0.0
          %v330 = vrot.slane %v329, 4
          %v331 = vadd.f32 %v329, %v330
          %v332 = vrot.slane %v331, 2
          %v333 = vadd.f32 %v331, %v332
          %v334 = vrot.slane %v333, 1
          %v335 = vadd.f32 %v333, %v334
          %v336 = vlog2.pop %v335
          %v337 = vmul.f32 %v336, 0.6931472
          %v338 = vadd.f32 %v337, %v325
          %v339 = vsub.f32 -2.0794415, %v338
          %v340 = vadd.f32 %v339, %v292
          %s341 = sadd.s32 %s290, 1
          %p342 = scmp.lt.s32.totalorder %s341, 0
          %s343 = ssub.s32 0, %s341
          %s344 = scalar_select %p342, %s343, %s341
          %s345 = sand.u32 %s344, 3
          %s346 = ssub.s32 0, %s345
          %s347 = scalar_select %p342, %s346, %s345
          %p348 = scmp.ne.s32.totalorder %s347, 0
          %p349 = scmp.lt.s32.totalorder %s347, 0
          %p350 = pnand %p349, %p348
          %p351 = pneg %p350
          %s352 = sadd.s32 %s347, 4
          %s353 = scalar_select %p351, %s352, %s347
          %p354 = scmp.eq.s32.totalorder %s353, 0
          // Predicated region
          $region36: #{tpu_custom_call.1} parent=32 // pred_check
            %p355 = pneg %p354
          $region37: #{tpu_custom_call.1} parent=32 // pred_check_branch
            %357 = sbr.rel (%p355) target = $region39
          $region38: #{tpu_custom_call.1} parent=32 // pred_region
            %v358 = vand.u32 2147483647, %v317
            %vm359 = vcmask 7168
            %v360 = vsel %vm359, %v358, 0.0
            %361 = vadd.xlane.f32.xlu0 %v360
            %v362 = vpop.xlane.xlu0 %361
            %v363 = vrot.slane %v362, 4
            %v364 = vadd.f32 %v362, %v363
            %v365 = vrot.slane %v364, 2
            %v366 = vadd.f32 %v364, %v365
            %v367 = vrot.slane %v366, 1
            %v368 = vadd.f32 %v366, %v367
            %s369 = vtos %v368
            %v370 = vsub.f32 %v340, %v292
            %v371 = vand.u32 2147483647, %v370
            %vm372 = vcmask 57344
            %v373 = vsel %vm372, %v371, 0.0
            %374 = vadd.xlane.f32.xlu0 %v373
            %v375 = vpop.xlane.xlu0 %374
            %v376 = vrot.slane %v375, 4
            %v377 = vadd.f32 %v375, %v376
            %v378 = vrot.slane %v377, 2
            %v379 = vadd.f32 %v377, %v378
            %v380 = vrot.slane %v379, 1
            %v381 = vadd.f32 %v379, %v380
            %s382 = vtos %v381
            %s383 = sadd.f32 %s369, %s382
            %s384 = smul.f32 %s383, 0.01
            %p385 = scmp.lt.f32.partialorder %s384, 0.0001
            %s386 = scalar_select %p385, 1, 0
          $region39: #{tpu_custom_call.1} parent=32 // pred_fallthru
            %s387 = sphi 0, %s386
          %p388 = pneg %p354
          // Predicated region
          $region40: #{tpu_custom_call.1} parent=32 // pred_check
            _
          $region41: #{tpu_custom_call.1} parent=32 // pred_check_branch
            %390 = sbr.rel (%p354) target = $region43
          $region42: #{tpu_custom_call.1} parent=32 // pred_region
            _
          $region43: #{tpu_custom_call.1} parent=32 // pred_fallthru
            %s391 = sphi %s387, %s293
        $region33: #{tpu_custom_call.1} parent=27 // loop_footer
          _
        $region34: #{tpu_custom_call.1} parent=27 // loop_footer_branch
          %289 = sbr.rel target = $region30
        $region35: #{tpu_custom_call.1} parent=27 // loop_exit
          _
        %v392 = vadd.f32 %v288, %v291
        %v393 = vadd.f32 %v392, %v292
        %v394 = vmul.f32 %v393, 1.442695
        %v395 = vpow.pop %v394
        %v396 = vmul.f32 %v395, %v287
        %vm397 = vcmask 64512
        %v398 = vsel %vm397, %v396, 0.0
        %399 = vadd.xlane.f32.xlu0 %v398
        %v400 = vpop.xlane.xlu0 %399
        %v401 = vrot.slane %v400, 4
        %v402 = vadd.f32 %v400, %v401
        %v403 = vrot.slane %v402, 2
        %v404 = vadd.f32 %v402, %v403
        %v405 = vrot.slane %v404, 1
        %v406 = vadd.f32 %v404, %v405
        %vm407 = vcmask 0
        %408 = vst.msk [vmem:[%s191] sm:$0x1] %vm407, %v406
        %409 = vst.msk [vmem:[%s180] sm:$0xff] %vm397, %v395
        %p410 = scmp.lt.s32.totalorder %s18, 1
        %s411 = scalar_select %p410, %s18, 1
        %s412 = scalar_lea.vmem %s2, %s411
        %s413 = sand.u32 %s104, 1
        %s414 = scalar_lea.sflag [#allocation3], %s413
        %s415 = sand.u32 %s104, 1
        %s416 = smul.addr %s415, 8
        %s417 = scalar_lea.vmem [#allocation2], %s416
        // Predicated region
        $region44: #{tpu_custom_call.1} parent=27 // pred_check
          %p418 = pneg %p88
        $region45: #{tpu_custom_call.1} parent=27 // pred_check_branch
          %420 = sbr.rel (%p418) target = $region47
        $region46: #{tpu_custom_call.1} parent=27 // pred_region
          _
        $region47: #{tpu_custom_call.1} parent=27 // pred_fallthru
          _
        // Predicated region
        $region48: #{tpu_custom_call.1} parent=27 // pred_check
          %p421 = pneg %p114
        $region49: #{tpu_custom_call.1} parent=27 // pred_check_branch
          %423 = sbr.rel (%p421) target = $region51
        $region50: #{tpu_custom_call.1} parent=27 // pred_region
          %s425 = ssub.s32 128, 128
          %426 = vsyncadd %s414, %s425
          %s427 = smul.addr %s18, 128
          %s428 = scalar_lea.hbm %s3, %s427
          %s430 = sshll.u32 %s417, 4
          %s431 = int_to_ptr.vmem [resolvable:$true] %s430
          %433 = dma.vmem_to_hbm [thread:$0]  %s431, 128, %s428, %s414
        $region51: #{tpu_custom_call.1} parent=27 // pred_fallthru
          _
      $region28: #{tpu_custom_call.1} parent=5 // pred_fallthru
        _
      %p434 = scmp.le.s32.totalorder 2, %s13
      // Predicated region
      $region52: #{tpu_custom_call.1} parent=5 // pred_check
        %p435 = pneg %p434
      $region53: #{tpu_custom_call.1} parent=5 // pred_check_branch
        %437 = sbr.rel (%p435) target = $region55
      $region54: #{tpu_custom_call.1} parent=5 // pred_region
        %s438 = ssub.s32 %s13, 2
        // Predicated region
        $region56: #{tpu_custom_call.1} parent=54 // pred_check
          %p439 = pneg %p94
        $region57: #{tpu_custom_call.1} parent=54 // pred_check_branch
          %441 = sbr.rel (%p439) target = $region59
        $region58: #{tpu_custom_call.1} parent=54 // pred_region
          %p442 = scmp.lt.s32.totalorder %s19, 1
          %s443 = scalar_select %p442, %s19, 1
          %s444 = scalar_lea.vmem %s2, %s443
        $region59: #{tpu_custom_call.1} parent=54 // pred_fallthru
          _
        // Predicated region
        $region60: #{tpu_custom_call.1} parent=54 // pred_check
          %p445 = pneg %p120
        $region61: #{tpu_custom_call.1} parent=54 // pred_check_branch
          %447 = sbr.rel (%p445) target = $region63
        $region62: #{tpu_custom_call.1} parent=54 // pred_region
          %s448 = sand.u32 %s105, 1
          %s449 = scalar_lea.sflag [#allocation3], %s448
          %s450 = sand.u32 %s105, 1
          %s451 = smul.addr %s450, 8
          %s452 = scalar_lea.vmem [#allocation2], %s451
          %453 = dma.done %s449, 128
        $region63: #{tpu_custom_call.1} parent=54 // pred_fallthru
          _
      $region55: #{tpu_custom_call.1} parent=5 // pred_fallthru
        _
    $region6: #{tpu_custom_call.1} parent=1 // loop_footer
      %s17 = sadd.s32 1, %s13
    $region7: #{tpu_custom_call.1} parent=1 // loop_footer_branch
      %12 = sbr.rel target = $region3
    $region8: #{tpu_custom_call.1} parent=1 // loop_exit
      _
    %454 = vsyncpa [#allocation3], 1
    %s455 = scalar_lea.sflag [#allocation3], 1
    %456 = vsyncpa %s455, 1

</llo_original>
